<compile_context>
chip_gen: v5e
topology: v5e:2x2
jax: 0.10.0
libtpu: 0.0.40
codegen_flags: <defaults>
</compile_context>

<pallas_src>
import functools

import jax
import jax.numpy as jnp
from jax.experimental import pallas as pl
from jax.experimental.pallas import tpu as pltpu


# --------------------------------------------------------------------------- #
# Kernel
# --------------------------------------------------------------------------- #
def _patch_embed_kernel(*refs, eps, use_norm, pack_k):
    """Refs: x (Bt, C, T) [, gamma (C,1), beta (C,1)], out, [pack scratch (T, C)].

    out block is (Bt, T, C) when pack_k == 1, else (Bt, T//k, k*C)."""
    if use_norm:
        x_ref, gamma_ref, beta_ref, o_ref = refs[0], refs[1], refs[2], refs[3]
        rest = refs[4:]
    else:
        x_ref, o_ref = refs[0], refs[1]
        rest = refs[2:]
    scr_ref = rest[0] if pack_k > 1 else None

    bt, c, t = x_ref.shape
    for b in range(bt):                                 # Bt is small and static
        x = x_ref[b]                                    # (C, T), native dtype
        if use_norm:
            # Single-pass stats in f32; HW stays on the 128-wide lane axis and
            # the reduce over C is a cheap sublane reduce.
            xf = x.astype(jnp.float32)
            mean = jnp.mean(xf, axis=0, keepdims=True)              # (1, T)
            ex2 = jnp.mean(xf * xf, axis=0, keepdims=True)          # (1, T)
            var = ex2 - mean * mean
            inv = jax.lax.rsqrt(var + eps)                          # EUP slot
            y = (xf - mean) * inv
            y = y * gamma_ref[...] + beta_ref[...]                  # (C,1) bcast
            y = y.astype(o_ref.dtype)                   # downcast BEFORE transpose
        else:
            y = x.astype(o_ref.dtype)                   # no f32 upcast on this path

        y_t = y.T                                       # (T, C): the transpose(1, 2)

        if pack_k == 1:
            o_ref[b] = y_t
        else:
            # Interleave k consecutive HW rows into one 128-lane output row:
            # out[r, j*C:(j+1)*C] = y_t[r*k + j, :].  Stage y_t in VMEM and use
            # sublane-strided reads (stride = k) to pick every k-th row.
            scr_ref[...] = y_t
            tp = t // pack_k
            for j in range(pack_k):
                o_ref[b, :, j * c:(j + 1) * c] = (
                    scr_ref[pl.ds(j, tp, stride=pack_k), :])


# --------------------------------------------------------------------------- #
# Tiling / VMEM planning
# --------------------------------------------------------------------------- #
def _round_up(x, m):
    return ((x + m - 1) // m) * m


def _vmem_budgets():
    """Generation-aware (scoped-VMEM limit, per-step HBM-traffic target)."""
    cap = None
    try:
        cap = int(getattr(pltpu.get_tpu_info(), "vmem_capacity_bytes", 0)) or None
    except Exception:
        cap = None
    if cap is None:
        cap = 64 * 1024 * 1024                      # assume the smallest (v7x-class) part
    if cap <= 96 * 1024 * 1024:                     # v7x: 64 MiB per TensorCore
        # Faster HBM -> amortize per-step fixed cost with bigger steps, but keep
        # headroom under the smaller physical VMEM.
        return min(48 * 1024 * 1024, cap * 3 // 4), 8 * 1024 * 1024
    # v5e / v6e: 128 MiB physical VMEM, ~0.8-1.4 TB/s HBM.
    return 64 * 1024 * 1024, 6 * 1024 * 1024


def _plan_blocks(B, C, HW, in_item, out_item, use_norm, vmem_limit, step_target):
    """Pick (Bt, tile_hw, pack_k, HWp) under an explicit per-step VMEM model."""
    budget = int(vmem_limit * 0.6)                  # headroom for compiler temporaries

    def step_vmem(bt, t, k):
        in_buf = 2 * bt * C * t * in_item                               # dbl-buffered input
        out_buf = 2 * bt * (t // k) * _round_up(k * C, 128) * out_item  # lane-padded output
        pack_scr = t * _round_up(C, 128) * out_item if k > 1 else 0     # staging buffer
        temps = bt * C * t * (16 if use_norm else 2 * max(in_item, out_item))
        return in_buf + out_buf + pack_scr + temps

    def step_hbm(bt, t):
        return bt * C * t * (in_item + out_item)

    # Lane-dense output packing factor (only when the packed row is exactly 128).
    pack_k = 128 // C if (0 < C < 128 and 128 % C == 0) else 1

    # Decide the HW extent the kernel sees.
    if HW % 128 == 0:
        HWp = HW
    elif step_vmem(1, HW, 1) <= budget:
        HWp, pack_k = HW, 1        # small unaligned image: one full-extent block, no copies
    else:
        # TODO(synk): tile along H instead when W % 128 == 0 to avoid pad/trim copies.
        HWp = _round_up(HW, 1024)  # 1024 keeps the padded extent divisor-friendly

    if HWp % 128 != 0:
        tile_hw = HWp
        pack_k = 1
    else:
        align = max(128, 8 * pack_k)        # keep (tile_hw // k) a multiple of 8 sublanes
        if HWp % align != 0:
            pack_k, align = 1, 128
        tile_hw = align
        for t in range(align, HWp + 1, align):
            if HWp % t != 0:
                continue
            if step_vmem(1, t, pack_k) > budget:
                break
            tile_hw = t
            if step_hbm(1, t) >= step_target:
                break

    # Fold whole images into one grid step when a full-HW tile is still tiny
    # (amortizes the ~0.35 us fixed cost per grid step).
    Bt = 1
    if tile_hw == HWp and step_hbm(1, HWp) < step_target:
        for bt in range(2, min(B, 8) + 1):
            if B % bt != 0:
                continue
            if step_vmem(bt, HWp, pack_k) > budget:
                break
            Bt = bt
            if step_hbm(bt, HWp) >= step_target:
                break

    return Bt, tile_hw, pack_k, HWp


# --------------------------------------------------------------------------- #
# Wrapper
# --------------------------------------------------------------------------- #
def patch_embed_forward(x, gamma=None, beta=None, *, use_norm=True, eps=1e-5):
    """x: (B, C, H, W) -> (B, H*W, C), optionally LayerNorm'ed over C."""
    B, C, H, W = x.shape
    HW = H * W
    out_dtype = x.dtype
    in_item = jnp.dtype(x.dtype).itemsize
    out_item = jnp.dtype(out_dtype).itemsize

    vmem_limit, step_target = _vmem_budgets()
    Bt, tile_hw, pack_k, HWp = _plan_blocks(
        B, C, HW, in_item, out_item, use_norm, vmem_limit, step_target)

    x_flat = x.reshape(B, C, HW)                        # free glue: flatten(2)
    if HWp != HW:
        x_flat = jnp.pad(x_flat, ((0, 0), (0, 0), (0, HWp - HW)))

    grid = (B // Bt, HWp // tile_hw)

    in_specs = [pl.BlockSpec((Bt, C, tile_hw), lambda bi, ti: (bi, 0, ti))]
    args = [x_flat]
    if use_norm:
        if gamma is None:
            gamma = jnp.ones((C,), jnp.float32)
        if beta is None:
            beta = jnp.zeros((C,), jnp.float32)
        gamma2 = jnp.asarray(gamma, jnp.float32).reshape(C, 1)
        beta2 = jnp.asarray(beta, jnp.float32).reshape(C, 1)
        in_specs += [pl.BlockSpec((C, 1), lambda bi, ti: (0, 0)),
                     pl.BlockSpec((C, 1), lambda bi, ti: (0, 0))]
        args += [gamma2, beta2]

    out_cols = pack_k * C
    out_rows = HWp // pack_k
    out_specs = pl.BlockSpec((Bt, tile_hw // pack_k, out_cols),
                             lambda bi, ti: (bi, ti, 0))
    out_shape = jax.ShapeDtypeStruct((B, out_rows, out_cols), out_dtype)

    scratch_shapes = []
    if pack_k > 1:
        scratch_shapes.append(pltpu.VMEM((tile_hw, C), out_dtype))

    kernel = functools.partial(_patch_embed_kernel, eps=eps, use_norm=use_norm,
                               pack_k=pack_k)

    # Pure HBM-bandwidth-bound op: tell XLA so it schedules/overlaps it well.
    cost = pl.CostEstimate(
        flops=(7 if use_norm else 1) * B * C * HWp,
        transcendentals=(B * HWp) if use_norm else 0,
        bytes_accessed=B * C * HWp * (in_item + out_item)
        + (2 * C * 4 if use_norm else 0),
    )

    out_packed = pl.pallas_call(
        kernel,
        out_shape=out_shape,
        grid_spec=pltpu.PrefetchScalarGridSpec(
            num_scalar_prefetch=0,
            grid=grid,                                  # both axes independent
            in_specs=in_specs,
            out_specs=out_specs,
            scratch_shapes=scratch_shapes,
        ),
        compiler_params=pltpu.CompilerParams(
            dimension_semantics=("parallel", "parallel"),
            vmem_limit_bytes=vmem_limit,
        ),
        cost_estimate=cost,
    )(*args)

    out = out_packed.reshape(B, HWp, C)                 # free: identical contiguous bytes
    if HWp != HW:
        out = out[:, :HW, :]
    return out


# --------------------------------------------------------------------------- #
# Pure-JAX reference + tests
# --------------------------------------------------------------------------- #
def patch_embed_reference(x, gamma=None, beta=None, *, use_norm=True, eps=1e-5):
    B, C, H, W = x.shape
    y = jnp.transpose(x.reshape(B, C, H * W), (0, 2, 1)).astype(jnp.float32)
    if use_norm:
        mean = jnp.mean(y, axis=-1, keepdims=True)
        var = jnp.mean((y - mean) ** 2, axis=-1, keepdims=True)
        y = (y - mean) * jax.lax.rsqrt(var + eps)
        y = y * jnp.asarray(gamma, jnp.float32) + jnp.asarray(beta, jnp.float32)
    return y.astype(x.dtype)


if __name__ == "__main__":
    key = jax.random.PRNGKey(0)
    k1, k2, k3, k4 = jax.random.split(key, 4)

    # 1) LayerNorm path, C=32 -> lane-dense packed output (k = 128 // 32 = 4).
    B, C, H, W = 2, 32, 16, 16
    x = jax.random.normal(k1, (B, C, H, W), jnp.float32)
    gamma = 1.0 + 0.01 * jax.random.normal(k2, (C,), jnp.float32)
    beta = 0.01 * jax.random.normal(k3, (C,), jnp.float32)
    out = jax.block_until_ready(patch_embed_forward(x, gamma, beta, use_norm=True))
    ref = patch_embed_reference(x, gamma, beta, use_norm=True)
    assert out.shape == (B, H * W, C)
    assert jnp.allclose(out, ref, atol=3e-5, rtol=3e-5), "norm/packed mismatch"

    # 2) LayerNorm path, C=96 (128 % C != 0) -> unpacked output path.
    C2 = 96
    x2 = jax.random.normal(k4, (B, C2, H, W), jnp.float32)
    g2 = 1.0 + 0.01 * jax.random.normal(k2, (C2,), jnp.float32)
    b2 = 0.01 * jax.random.normal(k3, (C2,), jnp.float32)
    out2 = jax.block_until_ready(patch_embed_forward(x2, g2, b2, use_norm=True))
    ref2 = patch_embed_reference(x2, g2, b2, use_norm=True)
    assert jnp.allclose(out2, ref2, atol=3e-5, rtol=3e-5), "norm/unpacked mismatch"

    # 3) norm_layer=None path: no gamma/beta inputs (and no dead DMAs), packed.
    out3 = jax.block_until_ready(patch_embed_forward(x, use_norm=False))
    ref3 = patch_embed_reference(x, use_norm=False)
    assert jnp.allclose(out3, ref3, atol=1e-6, rtol=1e-6), "no-norm mismatch"

    # 4) HW not a multiple of 128 (small image): single full-extent block path.
    x4 = jax.random.normal(k2, (B, C, 10, 10), jnp.float32)
    out4 = jax.block_until_ready(patch_embed_forward(x4, gamma, beta, use_norm=True))
    ref4 = patch_embed_reference(x4, gamma, beta, use_norm=True)
    assert out4.shape == (B, 100, C)
    assert jnp.allclose(out4, ref4, atol=3e-5, rtol=3e-5), "unaligned-HW mismatch"

    print("KERNEL_OK")
</pallas_src>

<mosaic_0001>
module attributes {stable_mosaic.version = 11 : i64} {
  func.func @_patch_embed_kernel(%arg0: i32, %arg1: i32, %arg2: memref<2x32x256xf32, #tpu.memory_space<vmem>>, %arg3: memref<32x1xf32, #tpu.memory_space<vmem>>, %arg4: memref<32x1xf32, #tpu.memory_space<vmem>>, %arg5: memref<2x64x128xf32, #tpu.memory_space<vmem>>, %arg6: memref<256x32xf32, #tpu.memory_space<vmem>>) attributes {dimension_semantics = [#tpu.dimension_semantics<parallel>, #tpu.dimension_semantics<parallel>], iteration_bounds = array<i64: 1, 1>, scalar_prefetch = 0 : i64, scratch_operands = 1 : i64, tpu.core_type = #tpu.core_type<tc>, window_params = [{transform_indices = @transform_0, window_bounds = array<i64: 2, 32, 256>}, {pipeline_mode = #tpu.pipeline_mode<synchronous>, transform_indices = @transform_1, window_bounds = array<i64: 32, 1>}, {pipeline_mode = #tpu.pipeline_mode<synchronous>, transform_indices = @transform_2, window_bounds = array<i64: 32, 1>}, {transform_indices = @transform_3, window_bounds = array<i64: 2, 64, 128>}]} {
    %c0 = arith.constant 0 : index
    %c0_0 = arith.constant 0 : index
    %c0_1 = arith.constant 0 : index
    %0 = vector.load %arg2[%c0, %c0_0, %c0_1] : memref<2x32x256xf32, #tpu.memory_space<vmem>>, vector<1x32x256xf32>
    %1 = vector.shape_cast %0 : vector<1x32x256xf32> to vector<32x256xf32>
    %cst = arith.constant dense<0.000000e+00> : vector<256xf32>
    %2 = vector.multi_reduction <add>, %1, %cst [0] : vector<32x256xf32> to vector<256xf32>
    %3 = vector.shape_cast %2 : vector<256xf32> to vector<1x256xf32>
    %cst_2 = arith.constant 3.200000e+01 : f32
    %4 = vector.broadcast %cst_2 : f32 to vector<1x256xf32>
    %5 = arith.divf %3, %4 : vector<1x256xf32>
    %6 = arith.mulf %1, %1 : vector<32x256xf32>
    %cst_3 = arith.constant dense<0.000000e+00> : vector<256xf32>
    %7 = vector.multi_reduction <add>, %6, %cst_3 [0] : vector<32x256xf32> to vector<256xf32>
    %8 = vector.shape_cast %7 : vector<256xf32> to vector<1x256xf32>
    %cst_4 = arith.constant 3.200000e+01 : f32
    %9 = vector.broadcast %cst_4 : f32 to vector<1x256xf32>
    %10 = arith.divf %8, %9 : vector<1x256xf32>
    %11 = arith.mulf %5, %5 : vector<1x256xf32>
    %12 = arith.subf %10, %11 : vector<1x256xf32>
    %cst_5 = arith.constant 9.99999974E-6 : f32
    %13 = vector.broadcast %cst_5 : f32 to vector<1x256xf32>
    %14 = arith.addf %12, %13 : vector<1x256xf32>
    %15 = math.rsqrt %14 : vector<1x256xf32>
    %16 = vector.broadcast %5 : vector<1x256xf32> to vector<32x256xf32>
    %17 = arith.subf %1, %16 : vector<32x256xf32>
    %18 = vector.broadcast %15 : vector<1x256xf32> to vector<32x256xf32>
    %19 = arith.mulf %17, %18 : vector<32x256xf32>
    %c0_6 = arith.constant 0 : index
    %c0_7 = arith.constant 0 : index
    %20 = vector.load %arg3[%c0_6, %c0_7] : memref<32x1xf32, #tpu.memory_space<vmem>>, vector<32x1xf32>
    %21 = vector.broadcast %20 : vector<32x1xf32> to vector<32x256xf32>
    %22 = arith.mulf %19, %21 : vector<32x256xf32>
    %c0_8 = arith.constant 0 : index
    %c0_9 = arith.constant 0 : index
    %23 = vector.load %arg4[%c0_8, %c0_9] : memref<32x1xf32, #tpu.memory_space<vmem>>, vector<32x1xf32>
    %24 = vector.broadcast %23 : vector<32x1xf32> to vector<32x256xf32>
    %25 = arith.addf %22, %24 : vector<32x256xf32>
    %26 = tpu.transpose %25, [1, 0] : vector<32x256xf32> -> vector<256x32xf32>
    %c0_10 = arith.constant 0 : index
    %c0_11 = arith.constant 0 : index
    %27 = vector.load %arg6[%c0_10, %c0_11] : memref<256x32xf32, #tpu.memory_space<vmem>>, vector<256x32xf32>
    tpu.vector_store %arg6[%c0_10, %c0_11], %26 {strides = array<i32>} : memref<256x32xf32, #tpu.memory_space<vmem>>, vector<256x32xf32>,
    %c0_12 = arith.constant 0 : index
    %c0_13 = arith.constant 0 : index
    %28 = tpu.strided_load %arg6[%c0_12, %c0_13] {strides = array<i32: 4, 1>} : memref<256x32xf32, #tpu.memory_space<vmem>>, vector<64x32xf32>
    %c0_14 = arith.constant 0 : index
    %c0_15 = arith.constant 0 : index
    %c0_16 = arith.constant 0 : index
    %29 = vector.load %arg5[%c0_14, %c0_15, %c0_16] : memref<2x64x128xf32, #tpu.memory_space<vmem>>, vector<1x64x32xf32>
    %30 = vector.shape_cast %29 : vector<1x64x32xf32> to vector<64x32xf32>
    %31 = vector.shape_cast %28 : vector<64x32xf32> to vector<1x64x32xf32>
    tpu.vector_store %arg5[%c0_14, %c0_15, %c0_16], %31 {strides = array<i32>} : memref<2x64x128xf32, #tpu.memory_space<vmem>>, vector<1x64x32xf32>,
    %c1 = arith.constant 1 : index
    %c0_17 = arith.constant 0 : index
    %32 = tpu.strided_load %arg6[%c1, %c0_17] {strides = array<i32: 4, 1>} : memref<256x32xf32, #tpu.memory_space<vmem>>, vector<64x32xf32>
    %c0_18 = arith.constant 0 : index
    %c0_19 = arith.constant 0 : index
    %c32 = arith.constant 32 : index
    %33 = vector.load %arg5[%c0_18, %c0_19, %c32] : memref<2x64x128xf32, #tpu.memory_space<vmem>>, vector<1x64x32xf32>
    %34 = vector.shape_cast %33 : vector<1x64x32xf32> to vector<64x32xf32>
    %35 = vector.shape_cast %32 : vector<64x32xf32> to vector<1x64x32xf32>
    tpu.vector_store %arg5[%c0_18, %c0_19, %c32], %35 {strides = array<i32>} : memref<2x64x128xf32, #tpu.memory_space<vmem>>, vector<1x64x32xf32>,
    %c2 = arith.constant 2 : index
    %c0_20 = arith.constant 0 : index
    %36 = tpu.strided_load %arg6[%c2, %c0_20] {strides = array<i32: 4, 1>} : memref<256x32xf32, #tpu.memory_space<vmem>>, vector<64x32xf32>
    %c0_21 = arith.constant 0 : index
    %c0_22 = arith.constant 0 : index
    %c64 = arith.constant 64 : index
    %37 = vector.load %arg5[%c0_21, %c0_22, %c64] : memref<2x64x128xf32, #tpu.memory_space<vmem>>, vector<1x64x32xf32>
    %38 = vector.shape_cast %37 : vector<1x64x32xf32> to vector<64x32xf32>
    %39 = vector.shape_cast %36 : vector<64x32xf32> to vector<1x64x32xf32>
    tpu.vector_store %arg5[%c0_21, %c0_22, %c64], %39 {strides = array<i32>} : memref<2x64x128xf32, #tpu.memory_space<vmem>>, vector<1x64x32xf32>,
    %c3 = arith.constant 3 : index
    %c0_23 = arith.constant 0 : index
    %40 = tpu.strided_load %arg6[%c3, %c0_23] {strides = array<i32: 4, 1>} : memref<256x32xf32, #tpu.memory_space<vmem>>, vector<64x32xf32>
    %c0_24 = arith.constant 0 : index
    %c0_25 = arith.constant 0 : index
    %c96 = arith.constant 96 : index
    %41 = vector.load %arg5[%c0_24, %c0_25, %c96] : memref<2x64x128xf32, #tpu.memory_space<vmem>>, vector<1x64x32xf32>
    %42 = vector.shape_cast %41 : vector<1x64x32xf32> to vector<64x32xf32>
    %43 = vector.shape_cast %40 : vector<64x32xf32> to vector<1x64x32xf32>
    tpu.vector_store %arg5[%c0_24, %c0_25, %c96], %43 {strides = array<i32>} : memref<2x64x128xf32, #tpu.memory_space<vmem>>, vector<1x64x32xf32>,
    %c1_26 = arith.constant 1 : index
    %c0_27 = arith.constant 0 : index
    %c0_28 = arith.constant 0 : index
    %44 = vector.load %arg2[%c1_26, %c0_27, %c0_28] : memref<2x32x256xf32, #tpu.memory_space<vmem>>, vector<1x32x256xf32>
    %45 = vector.shape_cast %44 : vector<1x32x256xf32> to vector<32x256xf32>
    %cst_29 = arith.constant dense<0.000000e+00> : vector<256xf32>
    %46 = vector.multi_reduction <add>, %45, %cst_29 [0] : vector<32x256xf32> to vector<256xf32>
    %47 = vector.shape_cast %46 : vector<256xf32> to vector<1x256xf32>
    %cst_30 = arith.constant 3.200000e+01 : f32
    %48 = vector.broadcast %cst_30 : f32 to vector<1x256xf32>
    %49 = arith.divf %47, %48 : vector<1x256xf32>
    %50 = arith.mulf %45, %45 : vector<32x256xf32>
    %cst_31 = arith.constant dense<0.000000e+00> : vector<256xf32>
    %51 = vector.multi_reduction <add>, %50, %cst_31 [0] : vector<32x256xf32> to vector<256xf32>
    %52 = vector.shape_cast %51 : vector<256xf32> to vector<1x256xf32>
    %cst_32 = arith.constant 3.200000e+01 : f32
    %53 = vector.broadcast %cst_32 : f32 to vector<1x256xf32>
    %54 = arith.divf %52, %53 : vector<1x256xf32>
    %55 = arith.mulf %49, %49 : vector<1x256xf32>
    %56 = arith.subf %54, %55 : vector<1x256xf32>
    %cst_33 = arith.constant 9.99999974E-6 : f32
    %57 = vector.broadcast %cst_33 : f32 to vector<1x256xf32>
    %58 = arith.addf %56, %57 : vector<1x256xf32>
    %59 = math.rsqrt %58 : vector<1x256xf32>
    %60 = vector.broadcast %49 : vector<1x256xf32> to vector<32x256xf32>
    %61 = arith.subf %45, %60 : vector<32x256xf32>
    %62 = vector.broadcast %59 : vector<1x256xf32> to vector<32x256xf32>
    %63 = arith.mulf %61, %62 : vector<32x256xf32>
    %c0_34 = arith.constant 0 : index
    %c0_35 = arith.constant 0 : index
    %64 = vector.load %arg3[%c0_34, %c0_35] : memref<32x1xf32, #tpu.memory_space<vmem>>, vector<32x1xf32>
    %65 = vector.broadcast %64 : vector<32x1xf32> to vector<32x256xf32>
    %66 = arith.mulf %63, %65 : vector<32x256xf32>
    %c0_36 = arith.constant 0 : index
    %c0_37 = arith.constant 0 : index
    %67 = vector.load %arg4[%c0_36, %c0_37] : memref<32x1xf32, #tpu.memory_space<vmem>>, vector<32x1xf32>
    %68 = vector.broadcast %67 : vector<32x1xf32> to vector<32x256xf32>
    %69 = arith.addf %66, %68 : vector<32x256xf32>
    %70 = tpu.transpose %69, [1, 0] : vector<32x256xf32> -> vector<256x32xf32>
    %c0_38 = arith.constant 0 : index
    %c0_39 = arith.constant 0 : index
    %71 = vector.load %arg6[%c0_38, %c0_39] : memref<256x32xf32, #tpu.memory_space<vmem>>, vector<256x32xf32>
    tpu.vector_store %arg6[%c0_38, %c0_39], %70 {strides = array<i32>} : memref<256x32xf32, #tpu.memory_space<vmem>>, vector<256x32xf32>,
    %c0_40 = arith.constant 0 : index
    %c0_41 = arith.constant 0 : index
    %72 = tpu.strided_load %arg6[%c0_40, %c0_41] {strides = array<i32: 4, 1>} : memref<256x32xf32, #tpu.memory_space<vmem>>, vector<64x32xf32>
    %c1_42 = arith.constant 1 : index
    %c0_43 = arith.constant 0 : index
    %c0_44 = arith.constant 0 : index
    %73 = vector.load %arg5[%c1_42, %c0_43, %c0_44] : memref<2x64x128xf32, #tpu.memory_space<vmem>>, vector<1x64x32xf32>
    %74 = vector.shape_cast %73 : vector<1x64x32xf32> to vector<64x32xf32>
    %75 = vector.shape_cast %72 : vector<64x32xf32> to vector<1x64x32xf32>
    tpu.vector_store %arg5[%c1_42, %c0_43, %c0_44], %75 {strides = array<i32>} : memref<2x64x128xf32, #tpu.memory_space<vmem>>, vector<1x64x32xf32>,
    %c1_45 = arith.constant 1 : index
    %c0_46 = arith.constant 0 : index
    %76 = tpu.strided_load %arg6[%c1_45, %c0_46] {strides = array<i32: 4, 1>} : memref<256x32xf32, #tpu.memory_space<vmem>>, vector<64x32xf32>
    %c1_47 = arith.constant 1 : index
    %c0_48 = arith.constant 0 : index
    %c32_49 = arith.constant 32 : index
    %77 = vector.load %arg5[%c1_47, %c0_48, %c32_49] : memref<2x64x128xf32, #tpu.memory_space<vmem>>, vector<1x64x32xf32>
    %78 = vector.shape_cast %77 : vector<1x64x32xf32> to vector<64x32xf32>
    %79 = vector.shape_cast %76 : vector<64x32xf32> to vector<1x64x32xf32>
    tpu.vector_store %arg5[%c1_47, %c0_48, %c32_49], %79 {strides = array<i32>} : memref<2x64x128xf32, #tpu.memory_space<vmem>>, vector<1x64x32xf32>,
    %c2_50 = arith.constant 2 : index
    %c0_51 = arith.constant 0 : index
    %80 = tpu.strided_load %arg6[%c2_50, %c0_51] {strides = array<i32: 4, 1>} : memref<256x32xf32, #tpu.memory_space<vmem>>, vector<64x32xf32>
    %c1_52 = arith.constant 1 : index
    %c0_53 = arith.constant 0 : index
    %c64_54 = arith.constant 64 : index
    %81 = vector.load %arg5[%c1_52, %c0_53, %c64_54] : memref<2x64x128xf32, #tpu.memory_space<vmem>>, vector<1x64x32xf32>
    %82 = vector.shape_cast %81 : vector<1x64x32xf32> to vector<64x32xf32>
    %83 = vector.shape_cast %80 : vector<64x32xf32> to vector<1x64x32xf32>
    tpu.vector_store %arg5[%c1_52, %c0_53, %c64_54], %83 {strides = array<i32>} : memref<2x64x128xf32, #tpu.memory_space<vmem>>, vector<1x64x32xf32>,
    %c3_55 = arith.constant 3 : index
    %c0_56 = arith.constant 0 : index
    %84 = tpu.strided_load %arg6[%c3_55, %c0_56] {strides = array<i32: 4, 1>} : memref<256x32xf32, #tpu.memory_space<vmem>>, vector<64x32xf32>
    %c1_57 = arith.constant 1 : index
    %c0_58 = arith.constant 0 : index
    %c96_59 = arith.constant 96 : index
    %85 = vector.load %arg5[%c1_57, %c0_58, %c96_59] : memref<2x64x128xf32, #tpu.memory_space<vmem>>, vector<1x64x32xf32>
    %86 = vector.shape_cast %85 : vector<1x64x32xf32> to vector<64x32xf32>
    %87 = vector.shape_cast %84 : vector<64x32xf32> to vector<1x64x32xf32>
    tpu.vector_store %arg5[%c1_57, %c0_58, %c96_59], %87 {strides = array<i32>} : memref<2x64x128xf32, #tpu.memory_space<vmem>>, vector<1x64x32xf32>,
    return
  }
  func.func @transform_0(%arg0: i32, %arg1: i32) -> (i32, i32, i32) {
    %c0_i32 = arith.constant 0 : i32
    %c0_i32_0 = arith.constant 0 : i32
    return %arg0, %c0_i32, %arg1 : i32, i32, i32
  }
  func.func @transform_1(%arg0: i32, %arg1: i32) -> (i32, i32) {
    %c0_i32 = arith.constant 0 : i32
    %c0_i32_0 = arith.constant 0 : i32
    %c0_i32_1 = arith.constant 0 : i32
    return %c0_i32, %c0_i32_0 : i32, i32
  }
  func.func @transform_2(%arg0: i32, %arg1: i32) -> (i32, i32) {
    %c0_i32 = arith.constant 0 : i32
    %c0_i32_0 = arith.constant 0 : i32
    %c0_i32_1 = arith.constant 0 : i32
    return %c0_i32, %c0_i32_0 : i32, i32
  }
  func.func @transform_3(%arg0: i32, %arg1: i32) -> (i32, i32, i32) {
    %c0_i32 = arith.constant 0 : i32
    %c0_i32_0 = arith.constant 0 : i32
    return %arg0, %arg1, %c0_i32 : i32, i32, i32
  }
}

</mosaic_0001>

<llo_original>
// kernel: tpu_custom_call.1
$region0: #{tpu_custom_call.1}
  #allocation0 [shape = 'u32[]', space=smem, size = 0x4, offset = 0x4, fixed_abs, tag = 'smem constant byte address 0x4 - core index']
  #allocation1 [shape = 'u32[72,128]{1,0:T(1,128)}', space=vmem, size = 0x9000, scoped, tag = 'internal scratch']
  #allocation2 [shape = 'f32[256,32]{1,0:T(8,128)}', space=vmem, size = 0x20000, scoped, tag = 'scratch operand']
  %s0 = inlined_call_operand.hbm [shape: f32[2,32,256], index: 0, kind: input, shape index: {}]
  %s1 = inlined_call_operand.vmem [shape: f32[32,1], index: 1, kind: input, shape index: {}]
  %s2 = inlined_call_operand.vmem [shape: f32[32,1], index: 2, kind: input, shape index: {}]
  %s3 = inlined_call_operand.hbm [shape: f32[2,64,128], index: 3, kind: output, shape index: {}]
  %s4 = sld [smem:[#allocation0]]
  $region26: #{tpu_custom_call.1} parent=0
    _
  %s6 = ssub.s32 1, %s4
  %s7 = scalar_select 0, %s6, %s4
  $region1: #{tpu_custom_call.1} parent=0
    #allocation3 [shape = 'u8[65536]{0}', space=vmem, size = 0x10000, scoped, tag = 'input window, operand 0, single buffered']
    #allocation4 [shape = 's32[1]{0}', space=sflag, size = 0x4, scoped, tag = 'scoped memory for tpu_custom_call.1']
    #allocation5 [shape = 's32[1]{0}', space=sflag, size = 0x4, scoped, tag = 'scoped memory for tpu_custom_call.1']
    #allocation6 [shape = 'u8[65536]{0}', space=vmem, size = 0x10000, scoped, tag = 'output window, operand 0, single buffered']
    %8 = vsyncpa [#allocation4], 0
    %9 = vsyncpa [#allocation5], 0
    // Predicated region
    $region2: #{tpu_custom_call.1} parent=1 // pred_check
      _
    $region3: #{tpu_custom_call.1} parent=1 // pred_check_branch
      %11 = sbr.rel (0) target = $region5
    $region4: #{tpu_custom_call.1} parent=1 // pred_region
      %13 = vsyncadd [#allocation4], 0
      %s14 = sshll.u32 %s0, 4
      %s15 = int_to_ptr.hbm [resolvable:$true] %s14
      %s16 = sshll.u32 [#allocation3], 4
      %s17 = int_to_ptr.vmem [resolvable:$true] %s16
      %22 = dma.hbm_to_vmem [thread:$0]  %s15, 2048, %s17, [#allocation4], 256, 256, 16
    $region5: #{tpu_custom_call.1} parent=1 // pred_fallthru
      _
    // Predicated region
    $region6: #{tpu_custom_call.1} parent=1 // pred_check
      _
    $region7: #{tpu_custom_call.1} parent=1 // pred_check_branch
      %24 = sbr.rel (0) target = $region9
    $region8: #{tpu_custom_call.1} parent=1 // pred_region
      _
    $region9: #{tpu_custom_call.1} parent=1 // pred_fallthru
      _
    // Predicated region
    $region10: #{tpu_custom_call.1} parent=1 // pred_check
      _
    $region11: #{tpu_custom_call.1} parent=1 // pred_check_branch
      %26 = sbr.rel (0) target = $region13
    $region12: #{tpu_custom_call.1} parent=1 // pred_region
      _
    $region13: #{tpu_custom_call.1} parent=1 // pred_fallthru
      _
    // Predicated region
    $region14: #{tpu_custom_call.1} parent=1 // pred_check
      _
    $region15: #{tpu_custom_call.1} parent=1 // pred_check_branch
      %28 = sbr.rel (0) target = $region17
    $region16: #{tpu_custom_call.1} parent=1 // pred_region
      %30 = dma.done [#allocation4], 2048
    $region17: #{tpu_custom_call.1} parent=1 // pred_fallthru
      _
    %v31 = vld [vmem:[#allocation3] sm:$0xff]
    %v32 = vld [vmem:[#allocation3 + $0x8] sm:$0xff]
    %v33 = vld [vmem:[#allocation3 + $0x10] sm:$0xff]
    %v34 = vld [vmem:[#allocation3 + $0x18] sm:$0xff]
    %v35 = vld [vmem:[#allocation3 + $0x20] sm:$0xff]
    %v36 = vld [vmem:[#allocation3 + $0x28] sm:$0xff]
    %v37 = vld [vmem:[#allocation3 + $0x30] sm:$0xff]
    %v38 = vld [vmem:[#allocation3 + $0x38] sm:$0xff]
    %v39 = vadd.f32 %v31, %v33
    %v40 = vadd.f32 %v39, %v35
    %v41 = vadd.f32 %v40, %v37
    %v42 = vrot.slane %v41, 4
    %v43 = vadd.f32 %v41, %v42
    %v44 = vrot.slane %v43, 2
    %v45 = vadd.f32 %v43, %v44
    %v46 = vrot.slane %v45, 1
    %v47 = vadd.f32 %v45, %v46
    %v48 = vadd.f32 %v32, %v34
    %v49 = vadd.f32 %v48, %v36
    %v50 = vadd.f32 %v49, %v38
    %v51 = vrot.slane %v50, 4
    %v52 = vadd.f32 %v50, %v51
    %v53 = vrot.slane %v52, 2
    %v54 = vadd.f32 %v52, %v53
    %v55 = vrot.slane %v54, 1
    %v56 = vadd.f32 %v54, %v55
    %v57 = vrcp.pop 32.0
    %v58 = vmul.f32 32.0, %v57
    %v59 = vsub.f32 1.0, %v58
    %v60 = vmul.f32 %v57, %v59
    %v61 = vadd.f32 %v57, %v60
    %vm62 = vweird.f32 %v57
    %v63 = vsel %vm62, %v57, %v61
    %v64 = vmul.f32 %v47, %v63
    %v65 = vmul.f32 %v56, %v63
    %v66 = vmul.f32 %v31, %v31
    %v67 = vmul.f32 %v32, %v32
    %v68 = vmul.f32 %v33, %v33
    %v69 = vmul.f32 %v34, %v34
    %v70 = vmul.f32 %v35, %v35
    %v71 = vmul.f32 %v36, %v36
    %v72 = vmul.f32 %v37, %v37
    %v73 = vmul.f32 %v38, %v38
    %v74 = vadd.f32 %v66, %v68
    %v75 = vadd.f32 %v74, %v70
    %v76 = vadd.f32 %v75, %v72
    %v77 = vrot.slane %v76, 4
    %v78 = vadd.f32 %v76, %v77
    %v79 = vrot.slane %v78, 2
    %v80 = vadd.f32 %v78, %v79
    %v81 = vrot.slane %v80, 1
    %v82 = vadd.f32 %v80, %v81
    %v83 = vadd.f32 %v67, %v69
    %v84 = vadd.f32 %v83, %v71
    %v85 = vadd.f32 %v84, %v73
    %v86 = vrot.slane %v85, 4
    %v87 = vadd.f32 %v85, %v86
    %v88 = vrot.slane %v87, 2
    %v89 = vadd.f32 %v87, %v88
    %v90 = vrot.slane %v89, 1
    %v91 = vadd.f32 %v89, %v90
    %v92 = vmul.f32 %v82, %v63
    %v93 = vmul.f32 %v91, %v63
    %v94 = vmul.f32 %v64, %v64
    %v95 = vmul.f32 %v65, %v65
    %v96 = vsub.f32 %v92, %v94
    %v97 = vsub.f32 %v93, %v95
    %v98 = vadd.f32 %v96, 1e-05
    %v99 = vadd.f32 %v97, 1e-05
    %v100 = vrsqrt.pop %v98
    %v101 = vmul.f32 %v100, %v98
    %v102 = vmul.f32 %v101, %v100
    %v103 = vmul.f32 0.5, %v102
    %v104 = vsub.f32 1.5, %v103
    %v105 = vmul.f32 %v100, %v104
    %vm106 = vweird.f32 %v98
    %vm107 = vweird.f32 %v100
    %vm108 = vmor %vm106, %vm107
    %v109 = vsel %vm108, %v100, %v105
    %v110 = vrsqrt.pop %v99
    %v111 = vmul.f32 %v110, %v99
    %v112 = vmul.f32 %v111, %v110
    %v113 = vmul.f32 0.5, %v112
    %v114 = vsub.f32 1.5, %v113
    %v115 = vmul.f32 %v110, %v114
    %vm116 = vweird.f32 %v99
    %vm117 = vweird.f32 %v110
    %vm118 = vmor %vm116, %vm117
    %v119 = vsel %vm118, %v110, %v115
    %v120 = vsub.f32 %v31, %v64
    %v121 = vsub.f32 %v32, %v65
    %v122 = vsub.f32 %v33, %v64
    %v123 = vsub.f32 %v34, %v65
    %v124 = vsub.f32 %v35, %v64
    %v125 = vsub.f32 %v36, %v65
    %v126 = vsub.f32 %v37, %v64
    %v127 = vsub.f32 %v38, %v65
    %v128 = vmul.f32 %v120, %v109
    %v129 = vmul.f32 %v121, %v119
    %v130 = vmul.f32 %v122, %v109
    %v131 = vmul.f32 %v123, %v119
    %v132 = vmul.f32 %v124, %v109
    %v133 = vmul.f32 %v125, %v119
    %v134 = vmul.f32 %v126, %v109
    %v135 = vmul.f32 %v127, %v119
    %v136 = vld [vmem:[%s1] sm:$0xff]
    %v137 = vld [vmem:[%s1 + $0x8] sm:$0xff]
    %v138 = vld [vmem:[%s1 + $0x10] sm:$0xff]
    %v139 = vld [vmem:[%s1 + $0x18] sm:$0xff]
    %141 = vset.pattern.permute.xlu0 0
    %142 = vperm.xlu0 %141, %v136
    %v143 = vpop.permute.xlu0 %142
    %146 = vset.pattern.permute.xlu0 0
    %147 = vperm.xlu0 %146, %v137
    %v148 = vpop.permute.xlu0 %147
    %151 = vset.pattern.permute.xlu0 0
    %152 = vperm.xlu0 %151, %v138
    %v153 = vpop.permute.xlu0 %152
    %156 = vset.pattern.permute.xlu0 0
    %157 = vperm.xlu0 %156, %v139
    %v158 = vpop.permute.xlu0 %157
    %v160 = vmul.f32 %v128, %v143
    %v161 = vmul.f32 %v129, %v143
    %v162 = vmul.f32 %v130, %v148
    %v163 = vmul.f32 %v131, %v148
    %v164 = vmul.f32 %v132, %v153
    %v165 = vmul.f32 %v133, %v153
    %v166 = vmul.f32 %v134, %v158
    %v167 = vmul.f32 %v135, %v158
    %v168 = vld [vmem:[%s2] sm:$0xff]
    %v169 = vld [vmem:[%s2 + $0x8] sm:$0xff]
    %v170 = vld [vmem:[%s2 + $0x10] sm:$0xff]
    %v171 = vld [vmem:[%s2 + $0x18] sm:$0xff]
    %173 = vset.pattern.permute.xlu0 0
    %174 = vperm.xlu0 %173, %v168
    %v175 = vpop.permute.xlu0 %174
    %178 = vset.pattern.permute.xlu0 0
    %179 = vperm.xlu0 %178, %v169
    %v180 = vpop.permute.xlu0 %179
    %183 = vset.pattern.permute.xlu0 0
    %184 = vperm.xlu0 %183, %v170
    %v185 = vpop.permute.xlu0 %184
    %188 = vset.pattern.permute.xlu0 0
    %189 = vperm.xlu0 %188, %v171
    %v190 = vpop.permute.xlu0 %189
    %v192 = vadd.f32 %v160, %v175
    %v193 = vadd.f32 %v161, %v175
    %v194 = vadd.f32 %v162, %v180
    %v195 = vadd.f32 %v163, %v180
    %v196 = vadd.f32 %v164, %v185
    %v197 = vadd.f32 %v165, %v185
    %v198 = vadd.f32 %v166, %v190
    %v199 = vadd.f32 %v167, %v190
    %200 = vxpose.xlu0.b32.start [1/16] %v192, 128
    %201 = vxpose.xlu0.b32.cont [2/16] %v194, 128
    %202 = vxpose.xlu0.b32.cont [3/16] %v196, 128
    %203 = vxpose.xlu0.b32.cont [4/16] %v198, 128
    %204 = vxpose.xlu0.b32.cont [5/16] 0.0, 128
    %205 = vxpose.xlu0.b32.cont [6/16] 0.0, 128
    %206 = vxpose.xlu0.b32.cont [7/16] 0.0, 128
    %207 = vxpose.xlu0.b32.cont [8/16] 0.0, 128
    %208 = vxpose.xlu0.b32.cont [9/16] 0.0, 128
    %209 = vxpose.xlu0.b32.cont [10/16] 0.0, 128
    %210 = vxpose.xlu0.b32.cont [11/16] 0.0, 128
    %211 = vxpose.xlu0.b32.cont [12/16] 0.0, 128
    %212 = vxpose.xlu0.b32.cont [13/16] 0.0, 128
    %213 = vxpose.xlu0.b32.cont [14/16] 0.0, 128
    %214 = vxpose.xlu0.b32.cont [15/16] 0.0, 128
    %215 = vxpose.xlu0.b32.end [16/16] 0.0, 128
    %v216 = vpop.trf.xlu0
    %v217 = vpop.trf.xlu0
    %v218 = vpop.trf.xlu0
    %v219 = vpop.trf.xlu0
    %v220 = vpop.trf.xlu0
    %v221 = vpop.trf.xlu0
    %v222 = vpop.trf.xlu0
    %v223 = vpop.trf.xlu0
    %v224 = vpop.trf.xlu0
    %v225 = vpop.trf.xlu0
    %v226 = vpop.trf.xlu0
    %v227 = vpop.trf.xlu0
    %v228 = vpop.trf.xlu0
    %v229 = vpop.trf.xlu0
    %v230 = vpop.trf.xlu0
    %v231 = vpop.trf.xlu0
    %232 = vxpose.xlu0.b32.start [1/16] %v193, 128
    %233 = vxpose.xlu0.b32.cont [2/16] %v195, 128
    %234 = vxpose.xlu0.b32.cont [3/16] %v197, 128
    %235 = vxpose.xlu0.b32.cont [4/16] %v199, 128
    %236 = vxpose.xlu0.b32.cont [5/16] 0.0, 128
    %237 = vxpose.xlu0.b32.cont [6/16] 0.0, 128
    %238 = vxpose.xlu0.b32.cont [7/16] 0.0, 128
    %239 = vxpose.xlu0.b32.cont [8/16] 0.0, 128
    %240 = vxpose.xlu0.b32.cont [9/16] 0.0, 128
    %241 = vxpose.xlu0.b32.cont [10/16] 0.0, 128
    %242 = vxpose.xlu0.b32.cont [11/16] 0.0, 128
    %243 = vxpose.xlu0.b32.cont [12/16] 0.0, 128
    %244 = vxpose.xlu0.b32.cont [13/16] 0.0, 128
    %245 = vxpose.xlu0.b32.cont [14/16] 0.0, 128
    %246 = vxpose.xlu0.b32.cont [15/16] 0.0, 128
    %247 = vxpose.xlu0.b32.end [16/16] 0.0, 128
    %v248 = vpop.trf.xlu0
    %v249 = vpop.trf.xlu0
    %v250 = vpop.trf.xlu0
    %v251 = vpop.trf.xlu0
    %v252 = vpop.trf.xlu0
    %v253 = vpop.trf.xlu0
    %v254 = vpop.trf.xlu0
    %v255 = vpop.trf.xlu0
    %v256 = vpop.trf.xlu0
    %v257 = vpop.trf.xlu0
    %v258 = vpop.trf.xlu0
    %v259 = vpop.trf.xlu0
    %v260 = vpop.trf.xlu0
    %v261 = vpop.trf.xlu0
    %v262 = vpop.trf.xlu0
    %v263 = vpop.trf.xlu0
    %vm264 = vcmask 261120
    %265 = vst.msk [vmem:[#allocation2] sm:$0xff] %vm264, %v216
    %266 = vst.msk [vmem:[#allocation2 + $0x8] sm:$0xff] %vm264, %v217
    %267 = vst.msk [vmem:[#allocation2 + $0x10] sm:$0xff] %vm264, %v218
    %268 = vst.msk [vmem:[#allocation2 + $0x18] sm:$0xff] %vm264, %v219
    %269 = vst.msk [vmem:[#allocation2 + $0x20] sm:$0xff] %vm264, %v220
    %270 = vst.msk [vmem:[#allocation2 + $0x28] sm:$0xff] %vm264, %v221
    %271 = vst.msk [vmem:[#allocation2 + $0x30] sm:$0xff] %vm264, %v222
    %272 = vst.msk [vmem:[#allocation2 + $0x38] sm:$0xff] %vm264, %v223
    %273 = vst.msk [vmem:[#allocation2 + $0x40] sm:$0xff] %vm264, %v224
    %274 = vst.msk [vmem:[#allocation2 + $0x48] sm:$0xff] %vm264, %v225
    %275 = vst.msk [vmem:[#allocation2 + $0x50] sm:$0xff] %vm264, %v226
    %276 = vst.msk [vmem:[#allocation2 + $0x58] sm:$0xff] %vm264, %v227
    %277 = vst.msk [vmem:[#allocation2 + $0x60] sm:$0xff] %vm264, %v228
    %278 = vst.msk [vmem:[#allocation2 + $0x68] sm:$0xff] %vm264, %v229
    %279 = vst.msk [vmem:[#allocation2 + $0x70] sm:$0xff] %vm264, %v230
    %280 = vst.msk [vmem:[#allocation2 + $0x78] sm:$0xff] %vm264, %v231
    %281 = vst.msk [vmem:[#allocation2 + $0x80] sm:$0xff] %vm264, %v248
    %282 = vst.msk [vmem:[#allocation2 + $0x88] sm:$0xff] %vm264, %v249
    %283 = vst.msk [vmem:[#allocation2 + $0x90] sm:$0xff] %vm264, %v250
    %284 = vst.msk [vmem:[#allocation2 + $0x98] sm:$0xff] %vm264, %v251
    %285 = vst.msk [vmem:[#allocation2 + $0xa0] sm:$0xff] %vm264, %v252
    %286 = vst.msk [vmem:[#allocation2 + $0xa8] sm:$0xff] %vm264, %v253
    %287 = vst.msk [vmem:[#allocation2 + $0xb0] sm:$0xff] %vm264, %v254
    %288 = vst.msk [vmem:[#allocation2 + $0xb8] sm:$0xff] %vm264, %v255
    %289 = vst.msk [vmem:[#allocation2 + $0xc0] sm:$0xff] %vm264, %v256
    %290 = vst.msk [vmem:[#allocation2 + $0xc8] sm:$0xff] %vm264, %v257
    %291 = vst.msk [vmem:[#allocation2 + $0xd0] sm:$0xff] %vm264, %v258
    %292 = vst.msk [vmem:[#allocation2 + $0xd8] sm:$0xff] %vm264, %v259
    %293 = vst.msk [vmem:[#allocation2 + $0xe0] sm:$0xff] %vm264, %v260
    %294 = vst.msk [vmem:[#allocation2 + $0xe8] sm:$0xff] %vm264, %v261
    %295 = vst.msk [vmem:[#allocation2 + $0xf0] sm:$0xff] %vm264, %v262
    %296 = vst.msk [vmem:[#allocation2 + $0xf8] sm:$0xff] %vm264, %v263
    %v297 = vld [vmem:[#allocation2] ss:$4 sm:$0xff]
    %s298 = scalar_lea.vmem [#allocation2], 32
    %v299 = vld [vmem:[%s298] ss:$4 sm:$0xff]
    %s300 = scalar_lea.vmem [#allocation2], 64
    %v301 = vld [vmem:[%s300] ss:$4 sm:$0xff]
    %s302 = scalar_lea.vmem [#allocation2], 96
    %v303 = vld [vmem:[%s302] ss:$4 sm:$0xff]
    %s304 = scalar_lea.vmem [#allocation2], 128
    %v305 = vld [vmem:[%s304] ss:$4 sm:$0xff]
    %s306 = scalar_lea.vmem [#allocation2], 160
    %v307 = vld [vmem:[%s306] ss:$4 sm:$0xff]
    %s308 = scalar_lea.vmem [#allocation2], 192
    %v309 = vld [vmem:[%s308] ss:$4 sm:$0xff]
    %s310 = scalar_lea.vmem [#allocation2], 224
    %v311 = vld [vmem:[%s310] ss:$4 sm:$0xff]
    %312 = vst.msk [vmem:[#allocation6] sm:$0xff] %vm264, %v297
    %313 = vst.msk [vmem:[#allocation6 + $0x8] sm:$0xff] %vm264, %v299
    %314 = vst.msk [vmem:[#allocation6 + $0x10] sm:$0xff] %vm264, %v301
    %315 = vst.msk [vmem:[#allocation6 + $0x18] sm:$0xff] %vm264, %v303
    %316 = vst.msk [vmem:[#allocation6 + $0x20] sm:$0xff] %vm264, %v305
    %317 = vst.msk [vmem:[#allocation6 + $0x28] sm:$0xff] %vm264, %v307
    %318 = vst.msk [vmem:[#allocation6 + $0x30] sm:$0xff] %vm264, %v309
    %319 = vst.msk [vmem:[#allocation6 + $0x38] sm:$0xff] %vm264, %v311
    %s320 = scalar_lea.vmem [#allocation2], 1
    %v321 = vld [vmem:[%s320] ss:$4 sm:$0xff]
    %s322 = scalar_lea.vmem [#allocation2], 33
    %v323 = vld [vmem:[%s322] ss:$4 sm:$0xff]
    %s324 = scalar_lea.vmem [#allocation2], 65
    %v325 = vld [vmem:[%s324] ss:$4 sm:$0xff]
    %s326 = scalar_lea.vmem [#allocation2], 97
    %v327 = vld [vmem:[%s326] ss:$4 sm:$0xff]
    %s328 = scalar_lea.vmem [#allocation2], 129
    %v329 = vld [vmem:[%s328] ss:$4 sm:$0xff]
    %s330 = scalar_lea.vmem [#allocation2], 161
    %v331 = vld [vmem:[%s330] ss:$4 sm:$0xff]
    %s332 = scalar_lea.vmem [#allocation2], 193
    %v333 = vld [vmem:[%s332] ss:$4 sm:$0xff]
    %s334 = scalar_lea.vmem [#allocation2], 225
    %v335 = vld [vmem:[%s334] ss:$4 sm:$0xff]
    %344 = vrot.lane.b32.xlu0 %v321, 32
    %v345 = vpop.permute.xlu0 %344
    %346 = vrot.lane.b32.xlu0 %v323, 32
    %v347 = vpop.permute.xlu0 %346
    %348 = vrot.lane.b32.xlu0 %v325, 32
    %v349 = vpop.permute.xlu0 %348
    %350 = vrot.lane.b32.xlu0 %v327, 32
    %v351 = vpop.permute.xlu0 %350
    %352 = vrot.lane.b32.xlu0 %v329, 32
    %v353 = vpop.permute.xlu0 %352
    %354 = vrot.lane.b32.xlu0 %v331, 32
    %v355 = vpop.permute.xlu0 %354
    %356 = vrot.lane.b32.xlu0 %v333, 32
    %v357 = vpop.permute.xlu0 %356
    %358 = vrot.lane.b32.xlu0 %v335, 32
    %v359 = vpop.permute.xlu0 %358
    %vm368 = vcmask 523520
    %369 = vst.msk [vmem:[#allocation6] sm:$0xff] %vm368, %v345
    %370 = vst.msk [vmem:[#allocation6 + $0x8] sm:$0xff] %vm368, %v347
    %371 = vst.msk [vmem:[#allocation6 + $0x10] sm:$0xff] %vm368, %v349
    %372 = vst.msk [vmem:[#allocation6 + $0x18] sm:$0xff] %vm368, %v351
    %373 = vst.msk [vmem:[#allocation6 + $0x20] sm:$0xff] %vm368, %v353
    %374 = vst.msk [vmem:[#allocation6 + $0x28] sm:$0xff] %vm368, %v355
    %375 = vst.msk [vmem:[#allocation6 + $0x30] sm:$0xff] %vm368, %v357
    %376 = vst.msk [vmem:[#allocation6 + $0x38] sm:$0xff] %vm368, %v359
    %s377 = scalar_lea.vmem [#allocation2], 2
    %v378 = vld [vmem:[%s377] ss:$4 sm:$0xff]
    %s379 = scalar_lea.vmem [#allocation2], 34
    %v380 = vld [vmem:[%s379] ss:$4 sm:$0xff]
    %s381 = scalar_lea.vmem [#allocation2], 66
    %v382 = vld [vmem:[%s381] ss:$4 sm:$0xff]
    %s383 = scalar_lea.vmem [#allocation2], 98
    %v384 = vld [vmem:[%s383] ss:$4 sm:$0xff]
    %s385 = scalar_lea.vmem [#allocation2], 130
    %v386 = vld [vmem:[%s385] ss:$4 sm:$0xff]
    %s387 = scalar_lea.vmem [#allocation2], 162
    %v388 = vld [vmem:[%s387] ss:$4 sm:$0xff]
    %s389 = scalar_lea.vmem [#allocation2], 194
    %v390 = vld [vmem:[%s389] ss:$4 sm:$0xff]
    %s391 = scalar_lea.vmem [#allocation2], 226
    %v392 = vld [vmem:[%s391] ss:$4 sm:$0xff]
    %401 = vrot.lane.b32.xlu0 %v378, 64
    %v402 = vpop.permute.xlu0 %401
    %403 = vrot.lane.b32.xlu0 %v380, 64
    %v404 = vpop.permute.xlu0 %403
    %405 = vrot.lane.b32.xlu0 %v382, 64
    %v406 = vpop.permute.xlu0 %405
    %407 = vrot.lane.b32.xlu0 %v384, 64
    %v408 = vpop.permute.xlu0 %407
    %409 = vrot.lane.b32.xlu0 %v386, 64
    %v410 = vpop.permute.xlu0 %409
    %411 = vrot.lane.b32.xlu0 %v388, 64
    %v412 = vpop.permute.xlu0 %411
    %413 = vrot.lane.b32.xlu0 %v390, 64
    %v414 = vpop.permute.xlu0 %413
    %415 = vrot.lane.b32.xlu0 %v392, 64
    %v416 = vpop.permute.xlu0 %415
    %vm425 = vcmask 785920
    %426 = vst.msk [vmem:[#allocation6] sm:$0xff] %vm425, %v402
    %427 = vst.msk [vmem:[#allocation6 + $0x8] sm:$0xff] %vm425, %v404
    %428 = vst.msk [vmem:[#allocation6 + $0x10] sm:$0xff] %vm425, %v406
    %429 = vst.msk [vmem:[#allocation6 + $0x18] sm:$0xff] %vm425, %v408
    %430 = vst.msk [vmem:[#allocation6 + $0x20] sm:$0xff] %vm425, %v410
    %431 = vst.msk [vmem:[#allocation6 + $0x28] sm:$0xff] %vm425, %v412
    %432 = vst.msk [vmem:[#allocation6 + $0x30] sm:$0xff] %vm425, %v414
    %433 = vst.msk [vmem:[#allocation6 + $0x38] sm:$0xff] %vm425, %v416
    %s434 = scalar_lea.vmem [#allocation2], 3
    %v435 = vld [vmem:[%s434] ss:$4 sm:$0xff]
    %s436 = scalar_lea.vmem [#allocation2], 35
    %v437 = vld [vmem:[%s436] ss:$4 sm:$0xff]
    %s438 = scalar_lea.vmem [#allocation2], 67
    %v439 = vld [vmem:[%s438] ss:$4 sm:$0xff]
    %s440 = scalar_lea.vmem [#allocation2], 99
    %v441 = vld [vmem:[%s440] ss:$4 sm:$0xff]
    %s442 = scalar_lea.vmem [#allocation2], 131
    %v443 = vld [vmem:[%s442] ss:$4 sm:$0xff]
    %s444 = scalar_lea.vmem [#allocation2], 163
    %v445 = vld [vmem:[%s444] ss:$4 sm:$0xff]
    %s446 = scalar_lea.vmem [#allocation2], 195
    %v447 = vld [vmem:[%s446] ss:$4 sm:$0xff]
    %s448 = scalar_lea.vmem [#allocation2], 227
    %v449 = vld [vmem:[%s448] ss:$4 sm:$0xff]
    %458 = vrot.lane.b32.xlu0 %v435, 96
    %v459 = vpop.permute.xlu0 %458
    %460 = vrot.lane.b32.xlu0 %v437, 96
    %v461 = vpop.permute.xlu0 %460
    %462 = vrot.lane.b32.xlu0 %v439, 96
    %v463 = vpop.permute.xlu0 %462
    %464 = vrot.lane.b32.xlu0 %v441, 96
    %v465 = vpop.permute.xlu0 %464
    %466 = vrot.lane.b32.xlu0 %v443, 96
    %v467 = vpop.permute.xlu0 %466
    %468 = vrot.lane.b32.xlu0 %v445, 96
    %v469 = vpop.permute.xlu0 %468
    %470 = vrot.lane.b32.xlu0 %v447, 96
    %v471 = vpop.permute.xlu0 %470
    %472 = vrot.lane.b32.xlu0 %v449, 96
    %v473 = vpop.permute.xlu0 %472
    %vm482 = vcmask 1048320
    %483 = vst.msk [vmem:[#allocation6] sm:$0xff] %vm482, %v459
    %484 = vst.msk [vmem:[#allocation6 + $0x8] sm:$0xff] %vm482, %v461
    %485 = vst.msk [vmem:[#allocation6 + $0x10] sm:$0xff] %vm482, %v463
    %486 = vst.msk [vmem:[#allocation6 + $0x18] sm:$0xff] %vm482, %v465
    %487 = vst.msk [vmem:[#allocation6 + $0x20] sm:$0xff] %vm482, %v467
    %488 = vst.msk [vmem:[#allocation6 + $0x28] sm:$0xff] %vm482, %v469
    %489 = vst.msk [vmem:[#allocation6 + $0x30] sm:$0xff] %vm482, %v471
    %490 = vst.msk [vmem:[#allocation6 + $0x38] sm:$0xff] %vm482, %v473
    %s491 = scalar_lea.vmem [#allocation3], 64
    %v492 = vld [vmem:[%s491] sm:$0xff]
    %v493 = vld [vmem:[%s491 + $0x8] sm:$0xff]
    %v494 = vld [vmem:[%s491 + $0x10] sm:$0xff]
    %v495 = vld [vmem:[%s491 + $0x18] sm:$0xff]
    %v496 = vld [vmem:[%s491 + $0x20] sm:$0xff]
    %v497 = vld [vmem:[%s491 + $0x28] sm:$0xff]
    %v498 = vld [vmem:[%s491 + $0x30] sm:$0xff]
    %v499 = vld [vmem:[%s491 + $0x38] sm:$0xff]
    %v500 = vadd.f32 %v492, %v494
    %v501 = vadd.f32 %v500, %v496
    %v502 = vadd.f32 %v501, %v498
    %v503 = vrot.slane %v502, 4
    %v504 = vadd.f32 %v502, %v503
    %v505 = vrot.slane %v504, 2
    %v506 = vadd.f32 %v504, %v505
    %v507 = vrot.slane %v506, 1
    %v508 = vadd.f32 %v506, %v507
    %v509 = vadd.f32 %v493, %v495
    %v510 = vadd.f32 %v509, %v497
    %v511 = vadd.f32 %v510, %v499
    %v512 = vrot.slane %v511, 4
    %v513 = vadd.f32 %v511, %v512
    %v514 = vrot.slane %v513, 2
    %v515 = vadd.f32 %v513, %v514
    %v516 = vrot.slane %v515, 1
    %v517 = vadd.f32 %v515, %v516
    %v518 = vmul.f32 %v508, %v63
    %v519 = vmul.f32 %v517, %v63
    %v520 = vmul.f32 %v492, %v492
    %v521 = vmul.f32 %v493, %v493
    %v522 = vmul.f32 %v494, %v494
    %v523 = vmul.f32 %v495, %v495
    %v524 = vmul.f32 %v496, %v496
    %v525 = vmul.f32 %v497, %v497
    %v526 = vmul.f32 %v498, %v498
    %v527 = vmul.f32 %v499, %v499
    %v528 = vadd.f32 %v520, %v522
    %v529 = vadd.f32 %v528, %v524
    %v530 = vadd.f32 %v529, %v526
    %v531 = vrot.slane %v530, 4
    %v532 = vadd.f32 %v530, %v531
    %v533 = vrot.slane %v532, 2
    %v534 = vadd.f32 %v532, %v533
    %v535 = vrot.slane %v534, 1
    %v536 = vadd.f32 %v534, %v535
    %v537 = vadd.f32 %v521, %v523
    %v538 = vadd.f32 %v537, %v525
    %v539 = vadd.f32 %v538, %v527
    %v540 = vrot.slane %v539, 4
    %v541 = vadd.f32 %v539, %v540
    %v542 = vrot.slane %v541, 2
    %v543 = vadd.f32 %v541, %v542
    %v544 = vrot.slane %v543, 1
    %v545 = vadd.f32 %v543, %v544
    %v546 = vmul.f32 %v536, %v63
    %v547 = vmul.f32 %v545, %v63
    %v548 = vmul.f32 %v518, %v518
    %v549 = vmul.f32 %v519, %v519
    %v550 = vsub.f32 %v546, %v548
    %v551 = vsub.f32 %v547, %v549
    %v552 = vadd.f32 %v550, 1e-05
    %v553 = vadd.f32 %v551, 1e-05
    %v554 = vrsqrt.pop %v552
    %v555 = vmul.f32 %v554, %v552
    %v556 = vmul.f32 %v555, %v554
    %v557 = vmul.f32 0.5, %v556
    %v558 = vsub.f32 1.5, %v557
    %v559 = vmul.f32 %v554, %v558
    %vm560 = vweird.f32 %v552
    %vm561 = vweird.f32 %v554
    %vm562 = vmor %vm560, %vm561
    %v563 = vsel %vm562, %v554, %v559
    %v564 = vrsqrt.pop %v553
    %v565 = vmul.f32 %v564, %v553
    %v566 = vmul.f32 %v565, %v564
    %v567 = vmul.f32 0.5, %v566
    %v568 = vsub.f32 1.5, %v567
    %v569 = vmul.f32 %v564, %v568
    %vm570 = vweird.f32 %v553
    %vm571 = vweird.f32 %v564
    %vm572 = vmor %vm570, %vm571
    %v573 = vsel %vm572, %v564, %v569
    %v574 = vsub.f32 %v492, %v518
    %v575 = vsub.f32 %v493, %v519
    %v576 = vsub.f32 %v494, %v518
    %v577 = vsub.f32 %v495, %v519
    %v578 = vsub.f32 %v496, %v518
    %v579 = vsub.f32 %v497, %v519
    %v580 = vsub.f32 %v498, %v518
    %v581 = vsub.f32 %v499, %v519
    %v582 = vmul.f32 %v574, %v563
    %v583 = vmul.f32 %v575, %v573
    %v584 = vmul.f32 %v576, %v563
    %v585 = vmul.f32 %v577, %v573
    %v586 = vmul.f32 %v578, %v563
    %v587 = vmul.f32 %v579, %v573
    %v588 = vmul.f32 %v580, %v563
    %v589 = vmul.f32 %v581, %v573
    %v590 = vld [vmem:[%s1] sm:$0xff]
    %v591 = vld [vmem:[%s1 + $0x8] sm:$0xff]
    %v592 = vld [vmem:[%s1 + $0x10] sm:$0xff]
    %v593 = vld [vmem:[%s1 + $0x18] sm:$0xff]
    %595 = vset.pattern.permute.xlu0 0
    %596 = vperm.xlu0 %595, %v590
    %v597 = vpop.permute.xlu0 %596
    %600 = vset.pattern.permute.xlu0 0
    %601 = vperm.xlu0 %600, %v591
    %v602 = vpop.permute.xlu0 %601
    %605 = vset.pattern.permute.xlu0 0
    %606 = vperm.xlu0 %605, %v592
    %v607 = vpop.permute.xlu0 %606
    %610 = vset.pattern.permute.xlu0 0
    %611 = vperm.xlu0 %610, %v593
    %v612 = vpop.permute.xlu0 %611
    %v614 = vmul.f32 %v582, %v597
    %v615 = vmul.f32 %v583, %v597
    %v616 = vmul.f32 %v584, %v602
    %v617 = vmul.f32 %v585, %v602
    %v618 = vmul.f32 %v586, %v607
    %v619 = vmul.f32 %v587, %v607
    %v620 = vmul.f32 %v588, %v612
    %v621 = vmul.f32 %v589, %v612
    %v622 = vld [vmem:[%s2] sm:$0xff]
    %v623 = vld [vmem:[%s2 + $0x8] sm:$0xff]
    %v624 = vld [vmem:[%s2 + $0x10] sm:$0xff]
    %v625 = vld [vmem:[%s2 + $0x18] sm:$0xff]
    %627 = vset.pattern.permute.xlu0 0
    %628 = vperm.xlu0 %627, %v622
    %v629 = vpop.permute.xlu0 %628
    %632 = vset.pattern.permute.xlu0 0
    %633 = vperm.xlu0 %632, %v623
    %v634 = vpop.permute.xlu0 %633
    %637 = vset.pattern.permute.xlu0 0
    %638 = vperm.xlu0 %637, %v624
    %v639 = vpop.permute.xlu0 %638
    %642 = vset.pattern.permute.xlu0 0
    %643 = vperm.xlu0 %642, %v625
    %v644 = vpop.permute.xlu0 %643
    %v646 = vadd.f32 %v614, %v629
    %v647 = vadd.f32 %v615, %v629
    %v648 = vadd.f32 %v616, %v634
    %v649 = vadd.f32 %v617, %v634
    %v650 = vadd.f32 %v618, %v639
    %v651 = vadd.f32 %v619, %v639
    %v652 = vadd.f32 %v620, %v644
    %v653 = vadd.f32 %v621, %v644
    %654 = vxpose.xlu0.b32.start [1/16] %v646, 128
    %655 = vxpose.xlu0.b32.cont [2/16] %v648, 128
    %656 = vxpose.xlu0.b32.cont [3/16] %v650, 128
    %657 = vxpose.xlu0.b32.cont [4/16] %v652, 128
    %658 = vxpose.xlu0.b32.cont [5/16] 0.0, 128
    %659 = vxpose.xlu0.b32.cont [6/16] 0.0, 128
    %660 = vxpose.xlu0.b32.cont [7/16] 0.0, 128
    %661 = vxpose.xlu0.b32.cont [8/16] 0.0, 128
    %662 = vxpose.xlu0.b32.cont [9/16] 0.0, 128
    %663 = vxpose.xlu0.b32.cont [10/16] 0.0, 128
    %664 = vxpose.xlu0.b32.cont [11/16] 0.0, 128
    %665 = vxpose.xlu0.b32.cont [12/16] 0.0, 128
    %666 = vxpose.xlu0.b32.cont [13/16] 0.0, 128
    %667 = vxpose.xlu0.b32.cont [14/16] 0.0, 128
    %668 = vxpose.xlu0.b32.cont [15/16] 0.0, 128
    %669 = vxpose.xlu0.b32.end [16/16] 0.0, 128
    %v670 = vpop.trf.xlu0
    %v671 = vpop.trf.xlu0
    %v672 = vpop.trf.xlu0
    %v673 = vpop.trf.xlu0
    %v674 = vpop.trf.xlu0
    %v675 = vpop.trf.xlu0
    %v676 = vpop.trf.xlu0
    %v677 = vpop.trf.xlu0
    %v678 = vpop.trf.xlu0
    %v679 = vpop.trf.xlu0
    %v680 = vpop.trf.xlu0
    %v681 = vpop.trf.xlu0
    %v682 = vpop.trf.xlu0
    %v683 = vpop.trf.xlu0
    %v684 = vpop.trf.xlu0
    %v685 = vpop.trf.xlu0
    %686 = vxpose.xlu0.b32.start [1/16] %v647, 128
    %687 = vxpose.xlu0.b32.cont [2/16] %v649, 128
    %688 = vxpose.xlu0.b32.cont [3/16] %v651, 128
    %689 = vxpose.xlu0.b32.cont [4/16] %v653, 128
    %690 = vxpose.xlu0.b32.cont [5/16] 0.0, 128
    %691 = vxpose.xlu0.b32.cont [6/16] 0.0, 128
    %692 = vxpose.xlu0.b32.cont [7/16] 0.0, 128
    %693 = vxpose.xlu0.b32.cont [8/16] 0.0, 128
    %694 = vxpose.xlu0.b32.cont [9/16] 0.0, 128
    %695 = vxpose.xlu0.b32.cont [10/16] 0.0, 128
    %696 = vxpose.xlu0.b32.cont [11/16] 0.0, 128
    %697 = vxpose.xlu0.b32.cont [12/16] 0.0, 128
    %698 = vxpose.xlu0.b32.cont [13/16] 0.0, 128
    %699 = vxpose.xlu0.b32.cont [14/16] 0.0, 128
    %700 = vxpose.xlu0.b32.cont [15/16] 0.0, 128
    %701 = vxpose.xlu0.b32.end [16/16] 0.0, 128
    %v702 = vpop.trf.xlu0
    %v703 = vpop.trf.xlu0
    %v704 = vpop.trf.xlu0
    %v705 = vpop.trf.xlu0
    %v706 = vpop.trf.xlu0
    %v707 = vpop.trf.xlu0
    %v708 = vpop.trf.xlu0
    %v709 = vpop.trf.xlu0
    %v710 = vpop.trf.xlu0
    %v711 = vpop.trf.xlu0
    %v712 = vpop.trf.xlu0
    %v713 = vpop.trf.xlu0
    %v714 = vpop.trf.xlu0
    %v715 = vpop.trf.xlu0
    %v716 = vpop.trf.xlu0
    %v717 = vpop.trf.xlu0
    %718 = vst.msk [vmem:[#allocation2] sm:$0xff] %vm264, %v670
    %719 = vst.msk [vmem:[#allocation2 + $0x8] sm:$0xff] %vm264, %v671
    %720 = vst.msk [vmem:[#allocation2 + $0x10] sm:$0xff] %vm264, %v672
    %721 = vst.msk [vmem:[#allocation2 + $0x18] sm:$0xff] %vm264, %v673
    %722 = vst.msk [vmem:[#allocation2 + $0x20] sm:$0xff] %vm264, %v674
    %723 = vst.msk [vmem:[#allocation2 + $0x28] sm:$0xff] %vm264, %v675
    %724 = vst.msk [vmem:[#allocation2 + $0x30] sm:$0xff] %vm264, %v676
    %725 = vst.msk [vmem:[#allocation2 + $0x38] sm:$0xff] %vm264, %v677
    %726 = vst.msk [vmem:[#allocation2 + $0x40] sm:$0xff] %vm264, %v678
    %727 = vst.msk [vmem:[#allocation2 + $0x48] sm:$0xff] %vm264, %v679
    %728 = vst.msk [vmem:[#allocation2 + $0x50] sm:$0xff] %vm264, %v680
    %729 = vst.msk [vmem:[#allocation2 + $0x58] sm:$0xff] %vm264, %v681
    %730 = vst.msk [vmem:[#allocation2 + $0x60] sm:$0xff] %vm264, %v682
    %731 = vst.msk [vmem:[#allocation2 + $0x68] sm:$0xff] %vm264, %v683
    %732 = vst.msk [vmem:[#allocation2 + $0x70] sm:$0xff] %vm264, %v684
    %733 = vst.msk [vmem:[#allocation2 + $0x78] sm:$0xff] %vm264, %v685
    %734 = vst.msk [vmem:[#allocation2 + $0x80] sm:$0xff] %vm264, %v702
    %735 = vst.msk [vmem:[#allocation2 + $0x88] sm:$0xff] %vm264, %v703
    %736 = vst.msk [vmem:[#allocation2 + $0x90] sm:$0xff] %vm264, %v704
    %737 = vst.msk [vmem:[#allocation2 + $0x98] sm:$0xff] %vm264, %v705
    %738 = vst.msk [vmem:[#allocation2 + $0xa0] sm:$0xff] %vm264, %v706
    %739 = vst.msk [vmem:[#allocation2 + $0xa8] sm:$0xff] %vm264, %v707
    %740 = vst.msk [vmem:[#allocation2 + $0xb0] sm:$0xff] %vm264, %v708
    %741 = vst.msk [vmem:[#allocation2 + $0xb8] sm:$0xff] %vm264, %v709
    %742 = vst.msk [vmem:[#allocation2 + $0xc0] sm:$0xff] %vm264, %v710
    %743 = vst.msk [vmem:[#allocation2 + $0xc8] sm:$0xff] %vm264, %v711
    %744 = vst.msk [vmem:[#allocation2 + $0xd0] sm:$0xff] %vm264, %v712
    %745 = vst.msk [vmem:[#allocation2 + $0xd8] sm:$0xff] %vm264, %v713
    %746 = vst.msk [vmem:[#allocation2 + $0xe0] sm:$0xff] %vm264, %v714
    %747 = vst.msk [vmem:[#allocation2 + $0xe8] sm:$0xff] %vm264, %v715
    %748 = vst.msk [vmem:[#allocation2 + $0xf0] sm:$0xff] %vm264, %v716
    %749 = vst.msk [vmem:[#allocation2 + $0xf8] sm:$0xff] %vm264, %v717
    %v750 = vld [vmem:[#allocation2] ss:$4 sm:$0xff]
    %v751 = vld [vmem:[%s298] ss:$4 sm:$0xff]
    %v752 = vld [vmem:[%s300] ss:$4 sm:$0xff]
    %v753 = vld [vmem:[%s302] ss:$4 sm:$0xff]
    %v754 = vld [vmem:[%s304] ss:$4 sm:$0xff]
    %v755 = vld [vmem:[%s306] ss:$4 sm:$0xff]
    %v756 = vld [vmem:[%s308] ss:$4 sm:$0xff]
    %v757 = vld [vmem:[%s310] ss:$4 sm:$0xff]
    %s758 = scalar_lea.vmem [#allocation6], 64
    %759 = vst.msk [vmem:[%s758] sm:$0xff] %vm264, %v750
    %760 = vst.msk [vmem:[%s758 + $0x8] sm:$0xff] %vm264, %v751
    %761 = vst.msk [vmem:[%s758 + $0x10] sm:$0xff] %vm264, %v752
    %762 = vst.msk [vmem:[%s758 + $0x18] sm:$0xff] %vm264, %v753
    %763 = vst.msk [vmem:[%s758 + $0x20] sm:$0xff] %vm264, %v754
    %764 = vst.msk [vmem:[%s758 + $0x28] sm:$0xff] %vm264, %v755
    %765 = vst.msk [vmem:[%s758 + $0x30] sm:$0xff] %vm264, %v756
    %766 = vst.msk [vmem:[%s758 + $0x38] sm:$0xff] %vm264, %v757
    %v767 = vld [vmem:[%s320] ss:$4 sm:$0xff]
    %v768 = vld [vmem:[%s322] ss:$4 sm:$0xff]
    %v769 = vld [vmem:[%s324] ss:$4 sm:$0xff]
    %v770 = vld [vmem:[%s326] ss:$4 sm:$0xff]
    %v771 = vld [vmem:[%s328] ss:$4 sm:$0xff]
    %v772 = vld [vmem:[%s330] ss:$4 sm:$0xff]
    %v773 = vld [vmem:[%s332] ss:$4 sm:$0xff]
    %v774 = vld [vmem:[%s334] ss:$4 sm:$0xff]
    %783 = vrot.lane.b32.xlu0 %v767, 32
    %v784 = vpop.permute.xlu0 %783
    %785 = vrot.lane.b32.xlu0 %v768, 32
    %v786 = vpop.permute.xlu0 %785
    %787 = vrot.lane.b32.xlu0 %v769, 32
    %v788 = vpop.permute.xlu0 %787
    %789 = vrot.lane.b32.xlu0 %v770, 32
    %v790 = vpop.permute.xlu0 %789
    %791 = vrot.lane.b32.xlu0 %v771, 32
    %v792 = vpop.permute.xlu0 %791
    %793 = vrot.lane.b32.xlu0 %v772, 32
    %v794 = vpop.permute.xlu0 %793
    %795 = vrot.lane.b32.xlu0 %v773, 32
    %v796 = vpop.permute.xlu0 %795
    %797 = vrot.lane.b32.xlu0 %v774, 32
    %v798 = vpop.permute.xlu0 %797
    %807 = vst.msk [vmem:[%s758] sm:$0xff] %vm368, %v784
    %808 = vst.msk [vmem:[%s758 + $0x8] sm:$0xff] %vm368, %v786
    %809 = vst.msk [vmem:[%s758 + $0x10] sm:$0xff] %vm368, %v788
    %810 = vst.msk [vmem:[%s758 + $0x18] sm:$0xff] %vm368, %v790
    %811 = vst.msk [vmem:[%s758 + $0x20] sm:$0xff] %vm368, %v792
    %812 = vst.msk [vmem:[%s758 + $0x28] sm:$0xff] %vm368, %v794
    %813 = vst.msk [vmem:[%s758 + $0x30] sm:$0xff] %vm368, %v796
    %814 = vst.msk [vmem:[%s758 + $0x38] sm:$0xff] %vm368, %v798
    %v815 = vld [vmem:[%s377] ss:$4 sm:$0xff]
    %v816 = vld [vmem:[%s379] ss:$4 sm:$0xff]
    %v817 = vld [vmem:[%s381] ss:$4 sm:$0xff]
    %v818 = vld [vmem:[%s383] ss:$4 sm:$0xff]
    %v819 = vld [vmem:[%s385] ss:$4 sm:$0xff]
    %v820 = vld [vmem:[%s387] ss:$4 sm:$0xff]
    %v821 = vld [vmem:[%s389] ss:$4 sm:$0xff]
    %v822 = vld [vmem:[%s391] ss:$4 sm:$0xff]
    %831 = vrot.lane.b32.xlu0 %v815, 64
    %v832 = vpop.permute.xlu0 %831
    %833 = vrot.lane.b32.xlu0 %v816, 64
    %v834 = vpop.permute.xlu0 %833
    %835 = vrot.lane.b32.xlu0 %v817, 64
    %v836 = vpop.permute.xlu0 %835
    %837 = vrot.lane.b32.xlu0 %v818, 64
    %v838 = vpop.permute.xlu0 %837
    %839 = vrot.lane.b32.xlu0 %v819, 64
    %v840 = vpop.permute.xlu0 %839
    %841 = vrot.lane.b32.xlu0 %v820, 64
    %v842 = vpop.permute.xlu0 %841
    %843 = vrot.lane.b32.xlu0 %v821, 64
    %v844 = vpop.permute.xlu0 %843
    %845 = vrot.lane.b32.xlu0 %v822, 64
    %v846 = vpop.permute.xlu0 %845
    %855 = vst.msk [vmem:[%s758] sm:$0xff] %vm425, %v832
    %856 = vst.msk [vmem:[%s758 + $0x8] sm:$0xff] %vm425, %v834
    %857 = vst.msk [vmem:[%s758 + $0x10] sm:$0xff] %vm425, %v836
    %858 = vst.msk [vmem:[%s758 + $0x18] sm:$0xff] %vm425, %v838
    %859 = vst.msk [vmem:[%s758 + $0x20] sm:$0xff] %vm425, %v840
    %860 = vst.msk [vmem:[%s758 + $0x28] sm:$0xff] %vm425, %v842
    %861 = vst.msk [vmem:[%s758 + $0x30] sm:$0xff] %vm425, %v844
    %862 = vst.msk [vmem:[%s758 + $0x38] sm:$0xff] %vm425, %v846
    %v863 = vld [vmem:[%s434] ss:$4 sm:$0xff]
    %v864 = vld [vmem:[%s436] ss:$4 sm:$0xff]
    %v865 = vld [vmem:[%s438] ss:$4 sm:$0xff]
    %v866 = vld [vmem:[%s440] ss:$4 sm:$0xff]
    %v867 = vld [vmem:[%s442] ss:$4 sm:$0xff]
    %v868 = vld [vmem:[%s444] ss:$4 sm:$0xff]
    %v869 = vld [vmem:[%s446] ss:$4 sm:$0xff]
    %v870 = vld [vmem:[%s448] ss:$4 sm:$0xff]
    %879 = vrot.lane.b32.xlu0 %v863, 96
    %v880 = vpop.permute.xlu0 %879
    %881 = vrot.lane.b32.xlu0 %v864, 96
    %v882 = vpop.permute.xlu0 %881
    %883 = vrot.lane.b32.xlu0 %v865, 96
    %v884 = vpop.permute.xlu0 %883
    %885 = vrot.lane.b32.xlu0 %v866, 96
    %v886 = vpop.permute.xlu0 %885
    %887 = vrot.lane.b32.xlu0 %v867, 96
    %v888 = vpop.permute.xlu0 %887
    %889 = vrot.lane.b32.xlu0 %v868, 96
    %v890 = vpop.permute.xlu0 %889
    %891 = vrot.lane.b32.xlu0 %v869, 96
    %v892 = vpop.permute.xlu0 %891
    %893 = vrot.lane.b32.xlu0 %v870, 96
    %v894 = vpop.permute.xlu0 %893
    %903 = vst.msk [vmem:[%s758] sm:$0xff] %vm482, %v880
    %904 = vst.msk [vmem:[%s758 + $0x8] sm:$0xff] %vm482, %v882
    %905 = vst.msk [vmem:[%s758 + $0x10] sm:$0xff] %vm482, %v884
    %906 = vst.msk [vmem:[%s758 + $0x18] sm:$0xff] %vm482, %v886
    %907 = vst.msk [vmem:[%s758 + $0x20] sm:$0xff] %vm482, %v888
    %908 = vst.msk [vmem:[%s758 + $0x28] sm:$0xff] %vm482, %v890
    %909 = vst.msk [vmem:[%s758 + $0x30] sm:$0xff] %vm482, %v892
    %910 = vst.msk [vmem:[%s758 + $0x38] sm:$0xff] %vm482, %v894
    // Predicated region
    $region18: #{tpu_custom_call.1} parent=1 // pred_check
      _
    $region19: #{tpu_custom_call.1} parent=1 // pred_check_branch
      %912 = sbr.rel (0) target = $region21
    $region20: #{tpu_custom_call.1} parent=1 // pred_region
      %914 = vsyncadd [#allocation5], 0
      %s915 = sshll.u32 [#allocation6], 4
      %s916 = int_to_ptr.vmem [resolvable:$true] %s915
      %s917 = sshll.u32 %s3, 4
      %s918 = int_to_ptr.hbm [resolvable:$true] %s917
      %923 = dma.vmem_to_hbm [thread:$0]  %s916, 2048, %s918, [#allocation5], 128, 128, 8
    $region21: #{tpu_custom_call.1} parent=1 // pred_fallthru
      _
    // Predicated region
    $region22: #{tpu_custom_call.1} parent=1 // pred_check
      _
    $region23: #{tpu_custom_call.1} parent=1 // pred_check_branch
      %925 = sbr.rel (0) target = $region25
    $region24: #{tpu_custom_call.1} parent=1 // pred_region
      %927 = dma.done [#allocation5], 2048
    $region25: #{tpu_custom_call.1} parent=1 // pred_fallthru
      _
    %928 = vsyncpa [#allocation4], 1
    %929 = vsyncpa [#allocation5], 1

</llo_original>
